<compile_context>
chip_gen: v5e
topology: v5e:2x2
jax: 0.10.0
libtpu: 0.0.40
codegen_flags: <defaults>
</compile_context>

<pallas_src>
import functools

import jax
import jax.numpy as jnp
import numpy as np
from jax import lax
from jax.experimental import pallas as pl
from jax.experimental.pallas import tpu as pltpu


# -----------------------------------------------------------------------------
# Fused encoder stage kernel: Conv3x3+ReLU -> Conv3x3+ReLU -> MaxPool2x2
# -----------------------------------------------------------------------------
def _stage_kernel(x_ref, bw1_ref, b1_ref, bw2_ref, b2_ref,
                  skip_ref, pool_ref, rp1, rp2, *, H, W, C1, C2):
    # x_ref   : (1, H, W*C1)  f32   input rows, channels packed on lanes
    # bw1_ref : (3, W*C1, W*C2) bf16  block-banded conv1 weights (one per ky)
    # b1_ref  : (1, W*C2)     f32   bias tiled along W
    # bw2_ref : (3, W*C2, W*C2) bf16
    # b2_ref  : (1, W*C2)     f32
    # skip_ref: (1, H, W*C2)  f32   pre-pool output (lane-dense)
    # pool_ref: (1, H//2, (W//2)*C2) f32 pooled output (lane-dense)
    # rp1/rp2 : VMEM (H+2, W*C1 / W*C2) f32  row-padded activations (halo)
    Ho, Wo = H // 2, W // 2
    WC2 = W * C2

    def conv3x3_relu(rp, src, bw_ref, b_ref):
        wc = src.shape[-1]
        # 1-row zero halo lives entirely in VMEM (no HBM jnp.pad pass).
        rp[0:1, :] = jnp.zeros((1, wc), jnp.float32)
        rp[H + 1:H + 2, :] = jnp.zeros((1, wc), jnp.float32)
        rp[1:H + 1, :] = src
        acc = jnp.zeros((H, WC2), jnp.float32)
        for dy in range(3):  # static unroll: 3 banded MXU matmuls
            acc = acc + jnp.dot(rp[dy:dy + H, :].astype(jnp.bfloat16),
                                bw_ref[dy],
                                preferred_element_type=jnp.float32)
        return jnp.maximum(acc + b_ref[...], 0.0)          # f32 epilogue

    y1 = conv3x3_relu(rp1, x_ref[0], bw1_ref, b1_ref)      # stays in VMEM
    y2 = conv3x3_relu(rp2, y1, bw2_ref, b2_ref)            # (H, W*C2) f32

    # pre-pool skip output: full 128-lane, unmasked stores
    skip_ref[0] = y2

    # ---- fused 2x2 max-pool (exact f32; static slices + concat only) ----
    # vertical: max of adjacent row pairs
    vmax = jnp.concatenate(
        [jnp.maximum(y2[2 * i:2 * i + 1, :], y2[2 * i + 1:2 * i + 2, :])
         for i in range(Ho)], axis=0)                      # (Ho, W*C2)
    # horizontal: max of adjacent C2-wide column blocks, packed lane-dense
    pool_ref[0] = jnp.concatenate(
        [jnp.maximum(vmax[:, (2 * b) * C2:(2 * b + 1) * C2],
                     vmax[:, (2 * b + 1) * C2:(2 * b + 2) * C2])
         for b in range(Wo)], axis=1)                      # (Ho, Wo*C2)


def _encoder_stage(x, bw1, b1d, bw2, b2d, H, W, C1, C2):
    """x: (N, H, W*C1) f32 -> (skip (N, H, W*C2), pooled (N, H//2, (W//2)*C2))."""
    N = x.shape[0]
    Ho, Wo = H // 2, W // 2
    WC1, WC2 = W * C1, W * C2
    kern = functools.partial(_stage_kernel, H=H, W=W, C1=C1, C2=C2)
    skip, pooled = pl.pallas_call(
        kern,
        out_shape=(jax.ShapeDtypeStruct((N, H, WC2), jnp.float32),
                   jax.ShapeDtypeStruct((N, Ho, Wo * C2), jnp.float32)),
        grid=(N,),
        in_specs=[
            pl.BlockSpec((1, H, WC1), lambda n: (n, 0, 0)),
            pl.BlockSpec((3, WC1, WC2), lambda n: (0, 0, 0)),
            pl.BlockSpec((1, WC2), lambda n: (0, 0)),
            pl.BlockSpec((3, WC2, WC2), lambda n: (0, 0, 0)),
            pl.BlockSpec((1, WC2), lambda n: (0, 0)),
        ],
        out_specs=(pl.BlockSpec((1, H, WC2), lambda n: (n, 0, 0)),
                   pl.BlockSpec((1, Ho, Wo * C2), lambda n: (n, 0, 0))),
        scratch_shapes=[pltpu.VMEM((H + 2, WC1), jnp.float32),
                        pltpu.VMEM((H + 2, WC2), jnp.float32)],
        compiler_params=pltpu.CompilerParams(
            dimension_semantics=("parallel",)),   # N=2 -> both v7x TCs busy
    )(x, bw1, b1d, bw2, b2d)
    return skip, pooled


# -----------------------------------------------------------------------------
# Host-side weight preprocessing: 3x3 HWIO -> block-banded (3, W*Cin, W*Cout)
# -----------------------------------------------------------------------------
def _banded_conv3x3_weight(w_hwio, W):
    kh, kw, cin, cout = w_hwio.shape
    bw = np.zeros((kh, W * cin, W * cout), np.float32)
    for dy in range(kh):
        for dx in range(kw):
            for xo in range(W):
                xi = xo + dx - 1
                if 0 <= xi < W:  # implicit zero padding along W
                    bw[dy, xi * cin:(xi + 1) * cin,
                       xo * cout:(xo + 1) * cout] = w_hwio[dy, dx]
    return bw


# -----------------------------------------------------------------------------
# Encoder (matches the PyTorch module's forward semantics, return_outputs=True)
# -----------------------------------------------------------------------------
class EncoderPallas:
    def __init__(self, features, scale_factors, key):
        if len(features) != len(scale_factors) + 1:
            raise ValueError("Incompatible number of features and scale_factors")
        # TODO(synk): only isotropic scale_factor == 2 poolers are implemented.
        assert all(int(f) == 2 for f in scale_factors)
        self.scale_factors = list(scale_factors)
        self.in_channels = features[0]
        self.out_channels = features[-1]
        self.params = []
        for inc, outc in zip(features[:-1], features[1:]):
            key, k1, k2, k3, k4 = jax.random.split(key, 5)
            # conv weights rounded to bf16 values (MXU operand precision),
            # stored as f32 masters; biases stay f32.
            w1 = (0.1 * jax.random.normal(k1, (3, 3, inc, outc), jnp.float32)
                  ).astype(jnp.bfloat16).astype(jnp.float32)
            b1 = 0.1 * jax.random.normal(k2, (outc,), jnp.float32)
            w2 = (0.1 * jax.random.normal(k3, (3, 3, outc, outc), jnp.float32)
                  ).astype(jnp.bfloat16).astype(jnp.float32)
            b2 = 0.1 * jax.random.normal(k4, (outc,), jnp.float32)
            self.params.append((w1, b1, w2, b2))
        self._op_cache = {}

    def __len__(self):
        return len(self.params)

    def _stage_operands(self, idx, W):
        key = (idx, W)
        if key not in self._op_cache:
            w1, b1, w2, b2 = self.params[idx]
            c2 = w1.shape[-1]
            bw1 = jnp.asarray(_banded_conv3x3_weight(np.asarray(w1), W),
                              jnp.bfloat16)
            bw2 = jnp.asarray(_banded_conv3x3_weight(np.asarray(w2), W),
                              jnp.bfloat16)
            b1d = jnp.tile(b1, W).reshape(1, W * c2)
            b2d = jnp.tile(b2, W).reshape(1, W * c2)
            self._op_cache[key] = (bw1, b1d, bw2, b2d)
        return self._op_cache[key]

    def __call__(self, x_nchw):
        N, C, H, W = x_nchw.shape
        assert C == self.in_channels
        assert H % (2 ** len(self)) == 0 and W % (2 ** len(self)) == 0
        # NCHW -> lane-dense NHWC rows, once at the boundary (reshape is free).
        x = jnp.transpose(x_nchw, (0, 2, 3, 1)).astype(jnp.float32)
        x = x.reshape(N, H, W * C)
        skips_nhwc = []
        h, w = H, W
        for idx, (w1, _b1, _w2, _b2) in enumerate(self.params):
            c1, c2 = w1.shape[2], w1.shape[3]
            bw1, b1d, bw2, b2d = self._stage_operands(idx, w)
            skip, x = _encoder_stage(x, bw1, b1d, bw2, b2d, h, w, c1, c2)
            skips_nhwc.append(skip.reshape(N, h, w, c2))  # free, contiguous
            h, w = h // 2, w // 2
        out_nhwc = x.reshape(N, h, w, self.out_channels)
        # back to the PyTorch NCHW convention only at the boundary
        out = jnp.transpose(out_nhwc, (0, 3, 1, 2))
        skips = [jnp.transpose(s, (0, 3, 1, 2)) for s in skips_nhwc]
        return out, skips


# -----------------------------------------------------------------------------
# Pure-JAX reference (mirrors the kernel's bf16-operand / f32-accumulate math)
# -----------------------------------------------------------------------------
def _conv_ref(x, w, b):
    xb = x.astype(jnp.bfloat16).astype(jnp.float32)   # bf16 MXU operands
    y = lax.conv_general_dilated(
        xb, w, window_strides=(1, 1), padding=((1, 1), (1, 1)),
        dimension_numbers=("NHWC", "HWIO", "NHWC"))
    return jax.nn.relu(y + b)


def _pool_ref(x):
    return lax.reduce_window(x, -jnp.inf, lax.max,
                             (1, 2, 2, 1), (1, 2, 2, 1), "VALID")


def _encoder_ref(enc, x_nchw):
    x = jnp.transpose(x_nchw, (0, 2, 3, 1)).astype(jnp.float32)
    outs = []
    for (w1, b1, w2, b2) in enc.params:
        x = _conv_ref(x, w1, b1)
        x = _conv_ref(x, w2, b2)
        outs.append(jnp.transpose(x, (0, 3, 1, 2)))
        x = _pool_ref(x)
    return jnp.transpose(x, (0, 3, 1, 2)), outs


# -----------------------------------------------------------------------------
if __name__ == "__main__":
    key = jax.random.PRNGKey(0)
    k_x, k_p = jax.random.split(key)

    features = [4, 8, 16]          # in_channels=4, out_channels=16
    scale_factors = [2, 2]
    x = jax.random.normal(k_x, (2, 4, 16, 16), jnp.float32)   # NCHW

    enc = EncoderPallas(features, scale_factors, k_p)

    out, skips = enc(x)
    out = jax.block_until_ready(out)
    skips = [jax.block_until_ready(s) for s in skips]

    # Correctness vs. a reference using the same bf16 MXU-operand precision.
    # Tolerance covers summation-order differences and rare bf16 re-rounding
    # of the inter-conv activation (accumulation itself is f32 everywhere).
    ref_out, ref_skips = _encoder_ref(enc, x)
    np.testing.assert_allclose(np.asarray(out), np.asarray(ref_out),
                               rtol=2e-3, atol=2e-3)
    for s, rs in zip(skips, ref_skips):
        np.testing.assert_allclose(np.asarray(s), np.asarray(rs),
                                   rtol=2e-3, atol=2e-3)

    assert out.shape == (2, 16, 4, 4)
    assert skips[0].shape == (2, 8, 16, 16) and skips[1].shape == (2, 16, 8, 8)

    print("KERNEL_OK")
</pallas_src>

<mosaic_0001>
module attributes {stable_mosaic.version = 11 : i64} {
  func.func @_stage_kernel(%arg0: i32, %arg1: memref<1x16x64xf32, #tpu.memory_space<vmem>>, %arg2: memref<3x64x128xbf16, #tpu.memory_space<vmem>>, %arg3: memref<1x128xf32, #tpu.memory_space<vmem>>, %arg4: memref<3x128x128xbf16, #tpu.memory_space<vmem>>, %arg5: memref<1x128xf32, #tpu.memory_space<vmem>>, %arg6: memref<1x16x128xf32, #tpu.memory_space<vmem>>, %arg7: memref<1x8x64xf32, #tpu.memory_space<vmem>>, %arg8: memref<18x64xf32, #tpu.memory_space<vmem>>, %arg9: memref<18x128xf32, #tpu.memory_space<vmem>>) attributes {dimension_semantics = [#tpu.dimension_semantics<parallel>], iteration_bounds = array<i64: 2>, scalar_prefetch = 0 : i64, scratch_operands = 2 : i64, tpu.core_type = #tpu.core_type<tc>, window_params = [{transform_indices = @transform_0, window_bounds = array<i64: 1, 16, 64>}, {pipeline_mode = #tpu.pipeline_mode<synchronous>, transform_indices = @transform_1, window_bounds = array<i64: 3, 64, 128>}, {pipeline_mode = #tpu.pipeline_mode<synchronous>, transform_indices = @transform_2, window_bounds = array<i64: 1, 128>}, {pipeline_mode = #tpu.pipeline_mode<synchronous>, transform_indices = @transform_3, window_bounds = array<i64: 3, 128, 128>}, {pipeline_mode = #tpu.pipeline_mode<synchronous>, transform_indices = @transform_4, window_bounds = array<i64: 1, 128>}, {transform_indices = @transform_5, window_bounds = array<i64: 1, 16, 128>}, {transform_indices = @transform_6, window_bounds = array<i64: 1, 8, 64>}]} {
    %c0 = arith.constant 0 : index
    %c0_0 = arith.constant 0 : index
    %c0_1 = arith.constant 0 : index
    %0 = vector.load %arg1[%c0, %c0_0, %c0_1] : memref<1x16x64xf32, #tpu.memory_space<vmem>>, vector<1x16x64xf32>
    %1 = vector.shape_cast %0 : vector<1x16x64xf32> to vector<16x64xf32>
    %cst = arith.constant 0.000000e+00 : f32
    %2 = vector.broadcast %cst : f32 to vector<1x64xf32>
    %c0_2 = arith.constant 0 : index
    %c0_3 = arith.constant 0 : index
    %3 = vector.load %arg8[%c0_2, %c0_3] : memref<18x64xf32, #tpu.memory_space<vmem>>, vector<1x64xf32>
    tpu.vector_store %arg8[%c0_2, %c0_3], %2 {strides = array<i32>} : memref<18x64xf32, #tpu.memory_space<vmem>>, vector<1x64xf32>,
    %cst_4 = arith.constant 0.000000e+00 : f32
    %4 = vector.broadcast %cst_4 : f32 to vector<1x64xf32>
    %c17 = arith.constant 17 : index
    %c0_5 = arith.constant 0 : index
    %5 = vector.load %arg8[%c17, %c0_5] : memref<18x64xf32, #tpu.memory_space<vmem>>, vector<1x64xf32>
    tpu.vector_store %arg8[%c17, %c0_5], %4 {strides = array<i32>} : memref<18x64xf32, #tpu.memory_space<vmem>>, vector<1x64xf32>,
    %c1 = arith.constant 1 : index
    %c0_6 = arith.constant 0 : index
    %6 = vector.load %arg8[%c1, %c0_6] : memref<18x64xf32, #tpu.memory_space<vmem>>, vector<16x64xf32>
    tpu.vector_store %arg8[%c1, %c0_6], %1 {strides = array<i32>} : memref<18x64xf32, #tpu.memory_space<vmem>>, vector<16x64xf32>,
    %cst_7 = arith.constant 0.000000e+00 : f32
    %7 = vector.broadcast %cst_7 : f32 to vector<16x128xf32>
    %c0_8 = arith.constant 0 : index
    %c0_9 = arith.constant 0 : index
    %8 = vector.load %arg8[%c0_8, %c0_9] : memref<18x64xf32, #tpu.memory_space<vmem>>, vector<16x64xf32>
    %9 = arith.truncf %8 : vector<16x64xf32> to vector<16x64xbf16>
    %c0_10 = arith.constant 0 : index
    %c0_11 = arith.constant 0 : index
    %c0_12 = arith.constant 0 : index
    %10 = vector.load %arg2[%c0_10, %c0_11, %c0_12] : memref<3x64x128xbf16, #tpu.memory_space<vmem>>, vector<1x64x128xbf16>
    %11 = vector.shape_cast %10 : vector<1x64x128xbf16> to vector<64x128xbf16>
    %cst_13 = arith.constant dense<0.000000e+00> : vector<16x128xf32>
    %12 = tpu.matmul %9, %11, %cst_13 {dimension_numbers = #tpu.dot_dimension_numbers<[1], [0], [0], [1], [0, 0, 1, 1], [], []>} : vector<16x64xbf16>, vector<64x128xbf16>, vector<16x128xf32> -> vector<16x128xf32>
    %13 = arith.addf %7, %12 : vector<16x128xf32>
    %c1_14 = arith.constant 1 : index
    %c0_15 = arith.constant 0 : index
    %14 = vector.load %arg8[%c1_14, %c0_15] : memref<18x64xf32, #tpu.memory_space<vmem>>, vector<16x64xf32>
    %15 = arith.truncf %14 : vector<16x64xf32> to vector<16x64xbf16>
    %c1_16 = arith.constant 1 : index
    %c0_17 = arith.constant 0 : index
    %c0_18 = arith.constant 0 : index
    %16 = vector.load %arg2[%c1_16, %c0_17, %c0_18] : memref<3x64x128xbf16, #tpu.memory_space<vmem>>, vector<1x64x128xbf16>
    %17 = vector.shape_cast %16 : vector<1x64x128xbf16> to vector<64x128xbf16>
    %cst_19 = arith.constant dense<0.000000e+00> : vector<16x128xf32>
    %18 = tpu.matmul %15, %17, %cst_19 {dimension_numbers = #tpu.dot_dimension_numbers<[1], [0], [0], [1], [0, 0, 1, 1], [], []>} : vector<16x64xbf16>, vector<64x128xbf16>, vector<16x128xf32> -> vector<16x128xf32>
    %19 = arith.addf %13, %18 : vector<16x128xf32>
    %c2 = arith.constant 2 : index
    %c0_20 = arith.constant 0 : index
    %20 = vector.load %arg8[%c2, %c0_20] : memref<18x64xf32, #tpu.memory_space<vmem>>, vector<16x64xf32>
    %21 = arith.truncf %20 : vector<16x64xf32> to vector<16x64xbf16>
    %c2_21 = arith.constant 2 : index
    %c0_22 = arith.constant 0 : index
    %c0_23 = arith.constant 0 : index
    %22 = vector.load %arg2[%c2_21, %c0_22, %c0_23] : memref<3x64x128xbf16, #tpu.memory_space<vmem>>, vector<1x64x128xbf16>
    %23 = vector.shape_cast %22 : vector<1x64x128xbf16> to vector<64x128xbf16>
    %cst_24 = arith.constant dense<0.000000e+00> : vector<16x128xf32>
    %24 = tpu.matmul %21, %23, %cst_24 {dimension_numbers = #tpu.dot_dimension_numbers<[1], [0], [0], [1], [0, 0, 1, 1], [], []>} : vector<16x64xbf16>, vector<64x128xbf16>, vector<16x128xf32> -> vector<16x128xf32>
    %25 = arith.addf %19, %24 : vector<16x128xf32>
    %c0_25 = arith.constant 0 : index
    %c0_26 = arith.constant 0 : index
    %26 = vector.load %arg3[%c0_25, %c0_26] : memref<1x128xf32, #tpu.memory_space<vmem>>, vector<1x128xf32>
    %27 = vector.broadcast %26 : vector<1x128xf32> to vector<16x128xf32>
    %28 = arith.addf %25, %27 : vector<16x128xf32>
    %cst_27 = arith.constant 0.000000e+00 : f32
    %29 = vector.broadcast %cst_27 : f32 to vector<16x128xf32>
    %30 = arith.maximumf %28, %29 : vector<16x128xf32>
    %cst_28 = arith.constant 0.000000e+00 : f32
    %31 = vector.broadcast %cst_28 : f32 to vector<1x128xf32>
    %c0_29 = arith.constant 0 : index
    %c0_30 = arith.constant 0 : index
    %32 = vector.load %arg9[%c0_29, %c0_30] : memref<18x128xf32, #tpu.memory_space<vmem>>, vector<1x128xf32>
    tpu.vector_store %arg9[%c0_29, %c0_30], %31 {strides = array<i32>} : memref<18x128xf32, #tpu.memory_space<vmem>>, vector<1x128xf32>,
    %cst_31 = arith.constant 0.000000e+00 : f32
    %33 = vector.broadcast %cst_31 : f32 to vector<1x128xf32>
    %c17_32 = arith.constant 17 : index
    %c0_33 = arith.constant 0 : index
    %34 = vector.load %arg9[%c17_32, %c0_33] : memref<18x128xf32, #tpu.memory_space<vmem>>, vector<1x128xf32>
    tpu.vector_store %arg9[%c17_32, %c0_33], %33 {strides = array<i32>} : memref<18x128xf32, #tpu.memory_space<vmem>>, vector<1x128xf32>,
    %c1_34 = arith.constant 1 : index
    %c0_35 = arith.constant 0 : index
    %35 = vector.load %arg9[%c1_34, %c0_35] : memref<18x128xf32, #tpu.memory_space<vmem>>, vector<16x128xf32>
    tpu.vector_store %arg9[%c1_34, %c0_35], %30 {strides = array<i32>} : memref<18x128xf32, #tpu.memory_space<vmem>>, vector<16x128xf32>,
    %cst_36 = arith.constant 0.000000e+00 : f32
    %36 = vector.broadcast %cst_36 : f32 to vector<16x128xf32>
    %c0_37 = arith.constant 0 : index
    %c0_38 = arith.constant 0 : index
    %37 = vector.load %arg9[%c0_37, %c0_38] : memref<18x128xf32, #tpu.memory_space<vmem>>, vector<16x128xf32>
    %38 = arith.truncf %37 : vector<16x128xf32> to vector<16x128xbf16>
    %c0_39 = arith.constant 0 : index
    %c0_40 = arith.constant 0 : index
    %c0_41 = arith.constant 0 : index
    %39 = vector.load %arg4[%c0_39, %c0_40, %c0_41] : memref<3x128x128xbf16, #tpu.memory_space<vmem>>, vector<1x128x128xbf16>
    %40 = vector.shape_cast %39 : vector<1x128x128xbf16> to vector<128x128xbf16>
    %cst_42 = arith.constant dense<0.000000e+00> : vector<16x128xf32>
    %41 = tpu.matmul %38, %40, %cst_42 {dimension_numbers = #tpu.dot_dimension_numbers<[1], [0], [0], [1], [0, 0, 1, 1], [], []>} : vector<16x128xbf16>, vector<128x128xbf16>, vector<16x128xf32> -> vector<16x128xf32>
    %42 = arith.addf %36, %41 : vector<16x128xf32>
    %c1_43 = arith.constant 1 : index
    %c0_44 = arith.constant 0 : index
    %43 = vector.load %arg9[%c1_43, %c0_44] : memref<18x128xf32, #tpu.memory_space<vmem>>, vector<16x128xf32>
    %44 = arith.truncf %43 : vector<16x128xf32> to vector<16x128xbf16>
    %c1_45 = arith.constant 1 : index
    %c0_46 = arith.constant 0 : index
    %c0_47 = arith.constant 0 : index
    %45 = vector.load %arg4[%c1_45, %c0_46, %c0_47] : memref<3x128x128xbf16, #tpu.memory_space<vmem>>, vector<1x128x128xbf16>
    %46 = vector.shape_cast %45 : vector<1x128x128xbf16> to vector<128x128xbf16>
    %cst_48 = arith.constant dense<0.000000e+00> : vector<16x128xf32>
    %47 = tpu.matmul %44, %46, %cst_48 {dimension_numbers = #tpu.dot_dimension_numbers<[1], [0], [0], [1], [0, 0, 1, 1], [], []>} : vector<16x128xbf16>, vector<128x128xbf16>, vector<16x128xf32> -> vector<16x128xf32>
    %48 = arith.addf %42, %47 : vector<16x128xf32>
    %c2_49 = arith.constant 2 : index
    %c0_50 = arith.constant 0 : index
    %49 = vector.load %arg9[%c2_49, %c0_50] : memref<18x128xf32, #tpu.memory_space<vmem>>, vector<16x128xf32>
    %50 = arith.truncf %49 : vector<16x128xf32> to vector<16x128xbf16>
    %c2_51 = arith.constant 2 : index
    %c0_52 = arith.constant 0 : index
    %c0_53 = arith.constant 0 : index
    %51 = vector.load %arg4[%c2_51, %c0_52, %c0_53] : memref<3x128x128xbf16, #tpu.memory_space<vmem>>, vector<1x128x128xbf16>
    %52 = vector.shape_cast %51 : vector<1x128x128xbf16> to vector<128x128xbf16>
    %cst_54 = arith.constant dense<0.000000e+00> : vector<16x128xf32>
    %53 = tpu.matmul %50, %52, %cst_54 {dimension_numbers = #tpu.dot_dimension_numbers<[1], [0], [0], [1], [0, 0, 1, 1], [], []>} : vector<16x128xbf16>, vector<128x128xbf16>, vector<16x128xf32> -> vector<16x128xf32>
    %54 = arith.addf %48, %53 : vector<16x128xf32>
    %c0_55 = arith.constant 0 : index
    %c0_56 = arith.constant 0 : index
    %55 = vector.load %arg5[%c0_55, %c0_56] : memref<1x128xf32, #tpu.memory_space<vmem>>, vector<1x128xf32>
    %56 = vector.broadcast %55 : vector<1x128xf32> to vector<16x128xf32>
    %57 = arith.addf %54, %56 : vector<16x128xf32>
    %cst_57 = arith.constant 0.000000e+00 : f32
    %58 = vector.broadcast %cst_57 : f32 to vector<16x128xf32>
    %59 = arith.maximumf %57, %58 : vector<16x128xf32>
    %c0_58 = arith.constant 0 : index
    %c0_59 = arith.constant 0 : index
    %c0_60 = arith.constant 0 : index
    %60 = vector.load %arg6[%c0_58, %c0_59, %c0_60] : memref<1x16x128xf32, #tpu.memory_space<vmem>>, vector<1x16x128xf32>
    %61 = vector.shape_cast %60 : vector<1x16x128xf32> to vector<16x128xf32>
    %62 = vector.shape_cast %59 : vector<16x128xf32> to vector<1x16x128xf32>
    tpu.vector_store %arg6[%c0_58, %c0_59, %c0_60], %62 {strides = array<i32>} : memref<1x16x128xf32, #tpu.memory_space<vmem>>, vector<1x16x128xf32>,
    %63 = vector.extract_strided_slice %59 {offsets = [0, 0], sizes = [1, 128], strides = [1, 1]} : vector<16x128xf32> to vector<1x128xf32>
    %64 = vector.extract_strided_slice %59 {offsets = [1, 0], sizes = [1, 128], strides = [1, 1]} : vector<16x128xf32> to vector<1x128xf32>
    %65 = arith.maximumf %63, %64 : vector<1x128xf32>
    %66 = vector.extract_strided_slice %59 {offsets = [2, 0], sizes = [1, 128], strides = [1, 1]} : vector<16x128xf32> to vector<1x128xf32>
    %67 = vector.extract_strided_slice %59 {offsets = [3, 0], sizes = [1, 128], strides = [1, 1]} : vector<16x128xf32> to vector<1x128xf32>
    %68 = arith.maximumf %66, %67 : vector<1x128xf32>
    %69 = vector.extract_strided_slice %59 {offsets = [4, 0], sizes = [1, 128], strides = [1, 1]} : vector<16x128xf32> to vector<1x128xf32>
    %70 = vector.extract_strided_slice %59 {offsets = [5, 0], sizes = [1, 128], strides = [1, 1]} : vector<16x128xf32> to vector<1x128xf32>
    %71 = arith.maximumf %69, %70 : vector<1x128xf32>
    %72 = vector.extract_strided_slice %59 {offsets = [6, 0], sizes = [1, 128], strides = [1, 1]} : vector<16x128xf32> to vector<1x128xf32>
    %73 = vector.extract_strided_slice %59 {offsets = [7, 0], sizes = [1, 128], strides = [1, 1]} : vector<16x128xf32> to vector<1x128xf32>
    %74 = arith.maximumf %72, %73 : vector<1x128xf32>
    %75 = vector.extract_strided_slice %59 {offsets = [8, 0], sizes = [1, 128], strides = [1, 1]} : vector<16x128xf32> to vector<1x128xf32>
    %76 = vector.extract_strided_slice %59 {offsets = [9, 0], sizes = [1, 128], strides = [1, 1]} : vector<16x128xf32> to vector<1x128xf32>
    %77 = arith.maximumf %75, %76 : vector<1x128xf32>
    %78 = vector.extract_strided_slice %59 {offsets = [10, 0], sizes = [1, 128], strides = [1, 1]} : vector<16x128xf32> to vector<1x128xf32>
    %79 = vector.extract_strided_slice %59 {offsets = [11, 0], sizes = [1, 128], strides = [1, 1]} : vector<16x128xf32> to vector<1x128xf32>
    %80 = arith.maximumf %78, %79 : vector<1x128xf32>
    %81 = vector.extract_strided_slice %59 {offsets = [12, 0], sizes = [1, 128], strides = [1, 1]} : vector<16x128xf32> to vector<1x128xf32>
    %82 = vector.extract_strided_slice %59 {offsets = [13, 0], sizes = [1, 128], strides = [1, 1]} : vector<16x128xf32> to vector<1x128xf32>
    %83 = arith.maximumf %81, %82 : vector<1x128xf32>
    %84 = vector.extract_strided_slice %59 {offsets = [14, 0], sizes = [1, 128], strides = [1, 1]} : vector<16x128xf32> to vector<1x128xf32>
    %85 = vector.extract_strided_slice %59 {offsets = [15, 0], sizes = [1, 128], strides = [1, 1]} : vector<16x128xf32> to vector<1x128xf32>
    %86 = arith.maximumf %84, %85 : vector<1x128xf32>
    %87 = tpu.concatenate %65, %68, %71, %74, %77, %80, %83, %86 in 0 : vector<1x128xf32>, vector<1x128xf32>, vector<1x128xf32>, vector<1x128xf32>, vector<1x128xf32>, vector<1x128xf32>, vector<1x128xf32>, vector<1x128xf32> -> vector<8x128xf32>
    %88 = vector.extract_strided_slice %87 {offsets = [0, 0], sizes = [8, 8], strides = [1, 1]} : vector<8x128xf32> to vector<8x8xf32>
    %89 = vector.extract_strided_slice %87 {offsets = [0, 8], sizes = [8, 8], strides = [1, 1]} : vector<8x128xf32> to vector<8x8xf32>
    %90 = arith.maximumf %88, %89 : vector<8x8xf32>
    %91 = vector.extract_strided_slice %87 {offsets = [0, 16], sizes = [8, 8], strides = [1, 1]} : vector<8x128xf32> to vector<8x8xf32>
    %92 = vector.extract_strided_slice %87 {offsets = [0, 24], sizes = [8, 8], strides = [1, 1]} : vector<8x128xf32> to vector<8x8xf32>
    %93 = arith.maximumf %91, %92 : vector<8x8xf32>
    %94 = vector.extract_strided_slice %87 {offsets = [0, 32], sizes = [8, 8], strides = [1, 1]} : vector<8x128xf32> to vector<8x8xf32>
    %95 = vector.extract_strided_slice %87 {offsets = [0, 40], sizes = [8, 8], strides = [1, 1]} : vector<8x128xf32> to vector<8x8xf32>
    %96 = arith.maximumf %94, %95 : vector<8x8xf32>
    %97 = vector.extract_strided_slice %87 {offsets = [0, 48], sizes = [8, 8], strides = [1, 1]} : vector<8x128xf32> to vector<8x8xf32>
    %98 = vector.extract_strided_slice %87 {offsets = [0, 56], sizes = [8, 8], strides = [1, 1]} : vector<8x128xf32> to vector<8x8xf32>
    %99 = arith.maximumf %97, %98 : vector<8x8xf32>
    %100 = vector.extract_strided_slice %87 {offsets = [0, 64], sizes = [8, 8], strides = [1, 1]} : vector<8x128xf32> to vector<8x8xf32>
    %101 = vector.extract_strided_slice %87 {offsets = [0, 72], sizes = [8, 8], strides = [1, 1]} : vector<8x128xf32> to vector<8x8xf32>
    %102 = arith.maximumf %100, %101 : vector<8x8xf32>
    %103 = vector.extract_strided_slice %87 {offsets = [0, 80], sizes = [8, 8], strides = [1, 1]} : vector<8x128xf32> to vector<8x8xf32>
    %104 = vector.extract_strided_slice %87 {offsets = [0, 88], sizes = [8, 8], strides = [1, 1]} : vector<8x128xf32> to vector<8x8xf32>
    %105 = arith.maximumf %103, %104 : vector<8x8xf32>
    %106 = vector.extract_strided_slice %87 {offsets = [0, 96], sizes = [8, 8], strides = [1, 1]} : vector<8x128xf32> to vector<8x8xf32>
    %107 = vector.extract_strided_slice %87 {offsets = [0, 104], sizes = [8, 8], strides = [1, 1]} : vector<8x128xf32> to vector<8x8xf32>
    %108 = arith.maximumf %106, %107 : vector<8x8xf32>
    %109 = vector.extract_strided_slice %87 {offsets = [0, 112], sizes = [8, 8], strides = [1, 1]} : vector<8x128xf32> to vector<8x8xf32>
    %110 = vector.extract_strided_slice %87 {offsets = [0, 120], sizes = [8, 8], strides = [1, 1]} : vector<8x128xf32> to vector<8x8xf32>
    %111 = arith.maximumf %109, %110 : vector<8x8xf32>
    %112 = tpu.concatenate %90, %93, %96, %99, %102, %105, %108, %111 in 1 : vector<8x8xf32>, vector<8x8xf32>, vector<8x8xf32>, vector<8x8xf32>, vector<8x8xf32>, vector<8x8xf32>, vector<8x8xf32>, vector<8x8xf32> -> vector<8x64xf32>
    %c0_61 = arith.constant 0 : index
    %c0_62 = arith.constant 0 : index
    %c0_63 = arith.constant 0 : index
    %113 = vector.load %arg7[%c0_61, %c0_62, %c0_63] : memref<1x8x64xf32, #tpu.memory_space<vmem>>, vector<1x8x64xf32>
    %114 = vector.shape_cast %113 : vector<1x8x64xf32> to vector<8x64xf32>
    %115 = vector.shape_cast %112 : vector<8x64xf32> to vector<1x8x64xf32>
    tpu.vector_store %arg7[%c0_61, %c0_62, %c0_63], %115 {strides = array<i32>} : memref<1x8x64xf32, #tpu.memory_space<vmem>>, vector<1x8x64xf32>,
    return
  }
  func.func @transform_0(%arg0: i32) -> (i32, i32, i32) {
    %c0_i32 = arith.constant 0 : i32
    %c0_i32_0 = arith.constant 0 : i32
    %c0_i32_1 = arith.constant 0 : i32
    return %arg0, %c0_i32, %c0_i32_0 : i32, i32, i32
  }
  func.func @transform_1(%arg0: i32) -> (i32, i32, i32) {
    %c0_i32 = arith.constant 0 : i32
    %c0_i32_0 = arith.constant 0 : i32
    %c0_i32_1 = arith.constant 0 : i32
    %c0_i32_2 = arith.constant 0 : i32
    return %c0_i32, %c0_i32_0, %c0_i32_1 : i32, i32, i32
  }
  func.func @transform_2(%arg0: i32) -> (i32, i32) {
    %c0_i32 = arith.constant 0 : i32
    %c0_i32_0 = arith.constant 0 : i32
    %c0_i32_1 = arith.constant 0 : i32
    return %c0_i32, %c0_i32_0 : i32, i32
  }
  func.func @transform_3(%arg0: i32) -> (i32, i32, i32) {
    %c0_i32 = arith.constant 0 : i32
    %c0_i32_0 = arith.constant 0 : i32
    %c0_i32_1 = arith.constant 0 : i32
    %c0_i32_2 = arith.constant 0 : i32
    return %c0_i32, %c0_i32_0, %c0_i32_1 : i32, i32, i32
  }
  func.func @transform_4(%arg0: i32) -> (i32, i32) {
    %c0_i32 = arith.constant 0 : i32
    %c0_i32_0 = arith.constant 0 : i32
    %c0_i32_1 = arith.constant 0 : i32
    return %c0_i32, %c0_i32_0 : i32, i32
  }
  func.func @transform_5(%arg0: i32) -> (i32, i32, i32) {
    %c0_i32 = arith.constant 0 : i32
    %c0_i32_0 = arith.constant 0 : i32
    %c0_i32_1 = arith.constant 0 : i32
    return %arg0, %c0_i32, %c0_i32_0 : i32, i32, i32
  }
  func.func @transform_6(%arg0: i32) -> (i32, i32, i32) {
    %c0_i32 = arith.constant 0 : i32
    %c0_i32_0 = arith.constant 0 : i32
    %c0_i32_1 = arith.constant 0 : i32
    return %arg0, %c0_i32, %c0_i32_0 : i32, i32, i32
  }
}

</mosaic_0001>

<llo_original>
// kernel: tpu_custom_call.1
$region0: #{tpu_custom_call.1}
  #allocation0 [shape = 'u32[]', space=smem, size = 0x4, offset = 0x4, fixed_abs, tag = 'smem constant byte address 0x4 - core index']
  #allocation1 [shape = 'u32[72,128]{1,0:T(1,128)}', space=vmem, size = 0x9000, scoped, tag = 'internal scratch']
  #allocation2 [shape = 'f32[18,64]{1,0:T(8,128)}', space=vmem, size = 0x3000, scoped, tag = 'scratch operand']
  #allocation3 [shape = 'f32[18,128]{1,0:T(8,128)}', space=vmem, size = 0x3000, scoped, tag = 'scratch operand']
  %s0 = inlined_call_operand.hbm [shape: f32[2,16,64], index: 0, kind: input, shape index: {}]
  %s1 = inlined_call_operand.hbm [shape: bf16[3,64,128], index: 1, kind: input, shape index: {}]
  %s2 = inlined_call_operand.vmem [shape: f32[1,128], index: 2, kind: input, shape index: {}]
  %s3 = inlined_call_operand.hbm [shape: bf16[3,128,128], index: 3, kind: input, shape index: {}]
  %s4 = inlined_call_operand.vmem [shape: f32[1,128], index: 4, kind: input, shape index: {}]
  %s5 = inlined_call_operand.hbm [shape: f32[2,16,128], index: 5, kind: output, shape index: {0}]
  %s6 = inlined_call_operand.hbm [shape: f32[2,8,64], index: 6, kind: output, shape index: {1}]
  %7 = xla_tuple %s5, %s6
  %s8 = sld [smem:[#allocation0]]
  $region73: #{tpu_custom_call.1} parent=0
    _
  %s10 = ssub.s32 1, %s8
  %s11 = scalar_select 0, %s10, %s8
  $region1: #{tpu_custom_call.1} parent=0
    #allocation4 [shape = 'u8[16384]{0}', space=vmem, size = 0x4000, scoped, tag = 'input window, operand 0']
    #allocation5 [shape = 's32[2]{0}', space=sflag, size = 0x8, scoped, tag = 'scoped memory for tpu_custom_call.1']
    #allocation6 [shape = 's32[2]{0}', space=sflag, size = 0x8, scoped, tag = 'scoped memory for tpu_custom_call.1']
    #allocation7 [shape = 'u8[49152]{0}', space=vmem, size = 0xc000, scoped, tag = 'input window, operand 1, single buffered']
    #allocation8 [shape = 's32[1]{0}', space=sflag, size = 0x4, scoped, tag = 'scoped memory for tpu_custom_call.1']
    #allocation9 [shape = 'u8[98304]{0}', space=vmem, size = 0x18000, scoped, tag = 'input window, operand 3, single buffered']
    #allocation10 [shape = 'u8[16384]{0}', space=vmem, size = 0x4000, scoped, tag = 'output window, operand 0']
    #allocation11 [shape = 'u8[8192]{0}', space=vmem, size = 0x2000, scoped, tag = 'output window, operand 1']
    #allocation12 [shape = 's32[2]{0}', space=sflag, size = 0x8, scoped, tag = 'scoped memory for tpu_custom_call.1']
    %12 = vsyncpa [#allocation5], 0
    %s13 = scalar_lea.sflag [#allocation5], 1
    %14 = vsyncpa %s13, 0
    %15 = vsyncpa [#allocation8], 0
    %16 = vsyncpa [#allocation6], 0
    %s17 = scalar_lea.sflag [#allocation6], 1
    %18 = vsyncpa %s17, 0
    %19 = vsyncpa [#allocation12], 0
    %s20 = scalar_lea.sflag [#allocation12], 1
    %21 = vsyncpa %s20, 0
    loop: start=0, step=1, limit=4
    $region2: #{tpu_custom_call.1} parent=1 // loop_pre_header
      _
    $region3: #{tpu_custom_call.1} parent=1 // loop_header
      %s23 = sphi 0, %s27
      %p24 = scmp.ge.s32.totalorder %s23, 4
      %s33 = sphi 0, %s35
      %s36 = sphi 0, %s33
      %s37 = sphi 0, %s36
      %s53 = sphi 0, %s37
      %s57 = sphi 0, %s57
      %s59 = sphi 0, %s57
      %s60 = sphi 0, %s59
      %s74 = sphi 0, %s60
      %s78 = sphi 0, %s78
      %s80 = sphi 0, %s78
      %s81 = sphi 0, %s80
      %s95 = sphi 0, %s81
      %s99 = sphi 0, %s99
      %s101 = sphi 0, %s99
      %s102 = sphi 0, %s101
      %s116 = sphi 0, %s102
      %s120 = sphi 0, %s120
      %s122 = sphi 0, %s120
      %s123 = sphi 0, %s122
      %s137 = sphi 0, %s123
      %s143 = sphi 0, %s145
      %s146 = sphi 0, %s143
      %s147 = sphi 0, %s146
      %s163 = sphi 0, %s147
      %s169 = sphi 0, %s171
      %s172 = sphi 0, %s169
      %s173 = sphi 0, %s172
      %s189 = sphi 0, %s173
    $region4: #{tpu_custom_call.1} parent=1 // loop_header_branch
      %26 = sbr.rel (%p24) target = $region8
    $region5: #{tpu_custom_call.1} parent=1 // loop_body
      %s28 = ssub.s32 %s23, 1
      %s29 = ssub.s32 %s23, 2
      %s30 = sadd.s32 %s23, 1
      %s31 = ssub.s32 %s23, %s30
      %p32 = scmp.eq.s32.totalorder %s31, 0
      %s34 = sadd.s32 %s33, 1
      %s35 = scalar_select %p32, %s33, %s34
      %p38 = pneg %p32
      %p39 = scmp.eq.s32.totalorder %s23, 1
      %p40 = por %p38, %p39
      %p41 = scmp.ne.s32.totalorder %s33, %s36
      %p42 = scmp.eq.s32.totalorder %s23, 0
      %p43 = por %p41, %p42
      %p44 = scmp.ne.s32.totalorder %s33, %s36
      %p45 = scmp.eq.s32.totalorder %s28, 1
      %p46 = por %p44, %p45
      %p47 = scmp.ne.s32.totalorder %s36, %s37
      %p48 = scmp.eq.s32.totalorder %s28, 0
      %p49 = por %p47, %p48
      %p50 = scmp.ne.s32.totalorder %s36, %s37
      %p51 = scmp.eq.s32.totalorder %s29, 1
      %p52 = por %p50, %p51
      %p54 = scmp.ne.s32.totalorder %s37, %s53
      %p55 = scmp.eq.s32.totalorder %s29, 0
      %p56 = por %p54, %p55
      %s58 = sadd.s32 %s57, 1
      %p61 = scmp.eq.s32.totalorder %s23, 1
      %p62 = scmp.ne.s32.totalorder %s57, %s59
      %p63 = scmp.eq.s32.totalorder %s23, 0
      %p64 = por %p62, %p63
      %p65 = scmp.ne.s32.totalorder %s57, %s59
      %p66 = scmp.eq.s32.totalorder %s28, 1
      %p67 = por %p65, %p66
      %p68 = scmp.ne.s32.totalorder %s59, %s60
      %p69 = scmp.eq.s32.totalorder %s28, 0
      %p70 = por %p68, %p69
      %p71 = scmp.ne.s32.totalorder %s59, %s60
      %p72 = scmp.eq.s32.totalorder %s29, 1
      %p73 = por %p71, %p72
      %p75 = scmp.ne.s32.totalorder %s60, %s74
      %p76 = scmp.eq.s32.totalorder %s29, 0
      %p77 = por %p75, %p76
      %s79 = sadd.s32 %s78, 1
      %p82 = scmp.eq.s32.totalorder %s23, 1
      %p83 = scmp.ne.s32.totalorder %s78, %s80
      %p84 = scmp.eq.s32.totalorder %s23, 0
      %p85 = por %p83, %p84
      %p86 = scmp.ne.s32.totalorder %s78, %s80
      %p87 = scmp.eq.s32.totalorder %s28, 1
      %p88 = por %p86, %p87
      %p89 = scmp.ne.s32.totalorder %s80, %s81
      %p90 = scmp.eq.s32.totalorder %s28, 0
      %p91 = por %p89, %p90
      %p92 = scmp.ne.s32.totalorder %s80, %s81
      %p93 = scmp.eq.s32.totalorder %s29, 1
      %p94 = por %p92, %p93
      %p96 = scmp.ne.s32.totalorder %s81, %s95
      %p97 = scmp.eq.s32.totalorder %s29, 0
      %p98 = por %p96, %p97
      %s100 = sadd.s32 %s99, 1
      %p103 = scmp.eq.s32.totalorder %s23, 1
      %p104 = scmp.ne.s32.totalorder %s99, %s101
      %p105 = scmp.eq.s32.totalorder %s23, 0
      %p106 = por %p104, %p105
      %p107 = scmp.ne.s32.totalorder %s99, %s101
      %p108 = scmp.eq.s32.totalorder %s28, 1
      %p109 = por %p107, %p108
      %p110 = scmp.ne.s32.totalorder %s101, %s102
      %p111 = scmp.eq.s32.totalorder %s28, 0
      %p112 = por %p110, %p111
      %p113 = scmp.ne.s32.totalorder %s101, %s102
      %p114 = scmp.eq.s32.totalorder %s29, 1
      %p115 = por %p113, %p114
      %p117 = scmp.ne.s32.totalorder %s102, %s116
      %p118 = scmp.eq.s32.totalorder %s29, 0
      %p119 = por %p117, %p118
      %s121 = sadd.s32 %s120, 1
      %p124 = scmp.eq.s32.totalorder %s23, 1
      %p125 = scmp.ne.s32.totalorder %s120, %s122
      %p126 = scmp.eq.s32.totalorder %s23, 0
      %p127 = por %p125, %p126
      %p128 = scmp.ne.s32.totalorder %s120, %s122
      %p129 = scmp.eq.s32.totalorder %s28, 1
      %p130 = por %p128, %p129
      %p131 = scmp.ne.s32.totalorder %s122, %s123
      %p132 = scmp.eq.s32.totalorder %s28, 0
      %p133 = por %p131, %p132
      %p134 = scmp.ne.s32.totalorder %s122, %s123
      %p135 = scmp.eq.s32.totalorder %s29, 1
      %p136 = por %p134, %p135
      %p138 = scmp.ne.s32.totalorder %s123, %s137
      %p139 = scmp.eq.s32.totalorder %s29, 0
      %p140 = por %p138, %p139
      %s141 = ssub.s32 %s23, %s30
      %p142 = scmp.eq.s32.totalorder %s141, 0
      %s144 = sadd.s32 %s143, 1
      %s145 = scalar_select %p142, %s143, %s144
      %p148 = pneg %p142
      %p149 = scmp.eq.s32.totalorder %s23, 1
      %p150 = por %p148, %p149
      %p151 = scmp.ne.s32.totalorder %s143, %s146
      %p152 = scmp.eq.s32.totalorder %s23, 0
      %p153 = por %p151, %p152
      %p154 = scmp.ne.s32.totalorder %s143, %s146
      %p155 = scmp.eq.s32.totalorder %s28, 1
      %p156 = por %p154, %p155
      %p157 = scmp.ne.s32.totalorder %s146, %s147
      %p158 = scmp.eq.s32.totalorder %s28, 0
      %p159 = por %p157, %p158
      %p160 = scmp.ne.s32.totalorder %s146, %s147
      %p161 = scmp.eq.s32.totalorder %s29, 1
      %p162 = por %p160, %p161
      %p164 = scmp.ne.s32.totalorder %s147, %s163
      %p165 = scmp.eq.s32.totalorder %s29, 0
      %p166 = por %p164, %p165
      %s167 = ssub.s32 %s23, %s30
      %p168 = scmp.eq.s32.totalorder %s167, 0
      %s170 = sadd.s32 %s169, 1
      %s171 = scalar_select %p168, %s169, %s170
      %p174 = pneg %p168
      %p175 = scmp.eq.s32.totalorder %s23, 1
      %p176 = por %p174, %p175
      %p177 = scmp.ne.s32.totalorder %s169, %s172
      %p178 = scmp.eq.s32.totalorder %s23, 0
      %p179 = por %p177, %p178
      %p180 = scmp.ne.s32.totalorder %s169, %s172
      %p181 = scmp.eq.s32.totalorder %s28, 1
      %p182 = por %p180, %p181
      %p183 = scmp.ne.s32.totalorder %s172, %s173
      %p184 = scmp.eq.s32.totalorder %s28, 0
      %p185 = por %p183, %p184
      %p186 = scmp.ne.s32.totalorder %s172, %s173
      %p187 = scmp.eq.s32.totalorder %s29, 1
      %p188 = por %p186, %p187
      %p190 = scmp.ne.s32.totalorder %s173, %s189
      %p191 = scmp.eq.s32.totalorder %s29, 0
      %p192 = por %p190, %p191
      %p193 = scmp.le.s32.totalorder 1, %s23
      %p194 = scmp.lt.s32.totalorder %s23, 3
      %p195 = pnand %p193, %p194
      %p196 = pneg %p195
      // Predicated region
      $region9: #{tpu_custom_call.1} parent=5 // pred_check
        _
      $region10: #{tpu_custom_call.1} parent=5 // pred_check_branch
        %198 = sbr.rel (%p195) target = $region12
      $region11: #{tpu_custom_call.1} parent=5 // pred_region
        %s199 = ssub.s32 %s23, 1
        // Predicated region
        $region13: #{tpu_custom_call.1} parent=11 // pred_check
          %p200 = pneg %p70
        $region14: #{tpu_custom_call.1} parent=11 // pred_check_branch
          %202 = sbr.rel (%p200) target = $region16
        $region15: #{tpu_custom_call.1} parent=11 // pred_region
          %204 = vsyncadd [#allocation8], 0
          %s205 = sshll.u32 %s1, 4
          %s206 = int_to_ptr.hbm [resolvable:$true] %s205
          %s207 = sshll.u32 [#allocation7], 4
          %s208 = int_to_ptr.vmem [resolvable:$true] %s207
          %213 = dma.hbm_to_vmem [thread:$0]  %s206, 1536, %s208, [#allocation8], 64, 64, 4
        $region16: #{tpu_custom_call.1} parent=11 // pred_fallthru
          _
        // Predicated region
        $region17: #{tpu_custom_call.1} parent=11 // pred_check
          %p214 = pneg %p91
        $region18: #{tpu_custom_call.1} parent=11 // pred_check_branch
          %216 = sbr.rel (%p214) target = $region20
        $region19: #{tpu_custom_call.1} parent=11 // pred_region
          _
        $region20: #{tpu_custom_call.1} parent=11 // pred_fallthru
          _
        // Predicated region
        $region21: #{tpu_custom_call.1} parent=11 // pred_check
          %p217 = pneg %p112
        $region22: #{tpu_custom_call.1} parent=11 // pred_check_branch
          %219 = sbr.rel (%p217) target = $region24
        $region23: #{tpu_custom_call.1} parent=11 // pred_region
          %221 = vsyncadd [#allocation8], 0
          %s222 = sshll.u32 %s3, 4
          %s223 = int_to_ptr.hbm [resolvable:$true] %s222
          %s224 = sshll.u32 [#allocation9], 4
          %s225 = int_to_ptr.vmem [resolvable:$true] %s224
          %230 = dma.hbm_to_vmem [thread:$0]  %s223, 3072, %s225, [#allocation8], 64, 64, 4
        $region24: #{tpu_custom_call.1} parent=11 // pred_fallthru
          _
        // Predicated region
        $region25: #{tpu_custom_call.1} parent=11 // pred_check
          %p231 = pneg %p133
        $region26: #{tpu_custom_call.1} parent=11 // pred_check_branch
          %233 = sbr.rel (%p231) target = $region28
        $region27: #{tpu_custom_call.1} parent=11 // pred_region
          _
        $region28: #{tpu_custom_call.1} parent=11 // pred_fallthru
          _
      $region12: #{tpu_custom_call.1} parent=5 // pred_fallthru
        _
      %p234 = scmp.lt.s32.totalorder %s23, 2
      // Predicated region
      $region29: #{tpu_custom_call.1} parent=5 // pred_check
        %p235 = pneg %p234
      $region30: #{tpu_custom_call.1} parent=5 // pred_check_branch
        %237 = sbr.rel (%p235) target = $region32
      $region31: #{tpu_custom_call.1} parent=5 // pred_region
        // Predicated region
        $region33: #{tpu_custom_call.1} parent=31 // pred_check
          %p238 = pneg %p43
        $region34: #{tpu_custom_call.1} parent=31 // pred_check_branch
          %240 = sbr.rel (%p238) target = $region36
        $region35: #{tpu_custom_call.1} parent=31 // pred_region
          %s241 = sand.u32 %s33, 1
          %s242 = scalar_lea.sflag [#allocation5], %s241
          %s243 = sand.u32 %s33, 1
          %s244 = smul.addr %s243, 16
          %s245 = scalar_lea.vmem [#allocation4], %s244
          %247 = vsyncadd %s242, 0
          %s248 = smul.addr %s23, 2
          %s249 = smul.addr %s248, 8
          %s250 = scalar_lea.hbm %s0, %s249
          %s251 = sshll.u32 %s250, 4
          %s252 = int_to_ptr.hbm [resolvable:$true] %s251
          %s253 = sshll.u32 %s245, 4
          %s254 = int_to_ptr.vmem [resolvable:$true] %s253
          %259 = dma.hbm_to_vmem [thread:$0]  %s252, 256, %s254, %s242, 128, 128, 8
        $region36: #{tpu_custom_call.1} parent=31 // pred_fallthru
          _
      $region32: #{tpu_custom_call.1} parent=5 // pred_fallthru
        _
      %p260 = scmp.le.s32.totalorder 1, %s23
      %p261 = scmp.lt.s32.totalorder %s23, 3
      %p262 = pnand %p260, %p261
      %p263 = pneg %p262
      // Predicated region
      $region37: #{tpu_custom_call.1} parent=5 // pred_check
        _
      $region38: #{tpu_custom_call.1} parent=5 // pred_check_branch
        %265 = sbr.rel (%p262) target = $region40
      $region39: #{tpu_custom_call.1} parent=5 // pred_region
        %s266 = ssub.s32 %s23, 1
        %s267 = sand.u32 %s36, 1
        %s268 = scalar_lea.sflag [#allocation5], %s267
        %s269 = sand.u32 %s36, 1
        %s270 = smul.addr %s269, 16
        %s271 = scalar_lea.vmem [#allocation4], %s270
        // Predicated region
        $region41: #{tpu_custom_call.1} parent=39 // pred_check
          %p272 = pneg %p49
        $region42: #{tpu_custom_call.1} parent=39 // pred_check_branch
          %274 = sbr.rel (%p272) target = $region44
        $region43: #{tpu_custom_call.1} parent=39 // pred_region
          %276 = dma.done %s268, 256
        $region44: #{tpu_custom_call.1} parent=39 // pred_fallthru
          _
        // Predicated region
        $region45: #{tpu_custom_call.1} parent=39 // pred_check
          %p277 = pneg %p70
        $region46: #{tpu_custom_call.1} parent=39 // pred_check_branch
          %279 = sbr.rel (%p277) target = $region48
        $region47: #{tpu_custom_call.1} parent=39 // pred_region
          %281 = dma.done [#allocation8], 1536
        $region48: #{tpu_custom_call.1} parent=39 // pred_fallthru
          _
        // Predicated region
        $region49: #{tpu_custom_call.1} parent=39 // pred_check
          %p282 = pneg %p112
        $region50: #{tpu_custom_call.1} parent=39 // pred_check_branch
          %284 = sbr.rel (%p282) target = $region52
        $region51: #{tpu_custom_call.1} parent=39 // pred_region
          %286 = dma.done [#allocation8], 3072
        $region52: #{tpu_custom_call.1} parent=39 // pred_fallthru
          _
        %s287 = sand.u32 %s36, 1
        %s288 = scalar_lea.sflag [#allocation5], %s287
        %s289 = sand.u32 %s36, 1
        %s290 = smul.addr %s289, 16
        %s291 = scalar_lea.vmem [#allocation4], %s290
        %p292 = pneg %p49
        %p293 = pneg %p46
        %p294 = pneg %p70
        %p295 = pneg %p67
        %p296 = pneg %p91
        %p297 = pneg %p88
        %p298 = pneg %p112
        %p299 = pneg %p109
        %p300 = pneg %p133
        %p301 = pneg %p130
        %p302 = pneg %p159
        %p303 = pneg %p156
        %s304 = sand.u32 %s146, 1
        %s305 = scalar_lea.sflag [#allocation6], %s304
        %s306 = sand.u32 %s146, 1
        %s307 = smul.addr %s306, 16
        %s308 = scalar_lea.vmem [#allocation10], %s307
        %p309 = pneg %p185
        %p310 = pneg %p182
        %s311 = sand.u32 %s172, 1
        %s312 = scalar_lea.sflag [#allocation12], %s311
        %s313 = sand.u32 %s172, 1
        %s314 = smul.addr %s313, 8
        %s315 = scalar_lea.vmem [#allocation11], %s314
        %v317 = vld [vmem:[%s271] sm:$0xff]
        %v318 = vld [vmem:[%s271 + $0x8] sm:$0xff]
        %vm319 = vcmask 516096
        %320 = vst.msk [vmem:[#allocation2] sm:$0x1] %vm319, 0.0
        %321 = vst.msk [vmem:[#allocation2 + $0x11] sm:$0x1] %vm319, 0.0
        %vm322 = vcmask 523264
        %323 = vst.msk [vmem:[#allocation2 + $0x1] sm:$0xff] %vm322, %v317
        %324 = vst.msk [vmem:[#allocation2 + $0x9] sm:$0xff] %vm322, %v318
        %v325 = vld [vmem:[#allocation2] sm:$0xff]
        %v326 = vld [vmem:[#allocation2 + $0x8] sm:$0xff]
        %v327 = vpack.c.bf16 %v326, %v325
        %v328 = vld [vmem:[#allocation7] sm:$0xf]
        %v329 = vld [vmem:[#allocation7 + $0x4] sm:$0xf]
        %v330 = vld [vmem:[#allocation7 + $0x8] sm:$0xf]
        %v331 = vld [vmem:[#allocation7 + $0xc] sm:$0xf]
        %v332 = vld [vmem:[#allocation7 + $0x10] sm:$0xf]
        %v333 = vld [vmem:[#allocation7 + $0x14] sm:$0xf]
        %v334 = vld [vmem:[#allocation7 + $0x18] sm:$0xf]
        %v335 = vld [vmem:[#allocation7 + $0x1c] sm:$0xf]
        %v336 = vld [vmem:[#allocation2 + $0x1] sm:$0xff]
        %v337 = vld [vmem:[#allocation2 + $0x9] sm:$0xff]
        %v338 = vpack.c.bf16 %v337, %v336
        %s339 = scalar_lea.vmem [#allocation7], 32
        %v340 = vld [vmem:[%s339] sm:$0xf]
        %v341 = vld [vmem:[%s339 + $0x4] sm:$0xf]
        %v342 = vld [vmem:[%s339 + $0x8] sm:$0xf]
        %v343 = vld [vmem:[%s339 + $0xc] sm:$0xf]
        %v344 = vld [vmem:[%s339 + $0x10] sm:$0xf]
        %v345 = vld [vmem:[%s339 + $0x14] sm:$0xf]
        %v346 = vld [vmem:[%s339 + $0x18] sm:$0xf]
        %v347 = vld [vmem:[%s339 + $0x1c] sm:$0xf]
        %v356 = vunpack.c.l.b16 %v340
        %v357 = vunpack.c.l.b16 %v341
        %v358 = vunpack.c.l.b16 %v342
        %v359 = vunpack.c.l.b16 %v343
        %v360 = vunpack.c.l.b16 %v344
        %v361 = vunpack.c.l.b16 %v345
        %v362 = vunpack.c.l.b16 %v346
        %v363 = vunpack.c.l.b16 %v347
        %v364 = vpack.c.b16 %v357, %v356
        %v365 = vpack.c.b16 %v359, %v358
        %v366 = vpack.c.b16 %v361, %v360
        %v367 = vpack.c.b16 %v363, %v362
        %v373 = vsel %vm322, %v338, 0
        %375 = vmatpush.bf16.msra.mxu0 0
        %376 = vmatpush.bf16.msra.mxu0 0
        %377 = vmatpush.bf16.msra.mxu0 0
        %378 = vmatpush.bf16.msra.mxu0 0
        %379 = vmatpush.bf16.msra.mxu0 %v367
        %380 = vmatpush.bf16.msra.mxu0 %v366
        %381 = vmatpush.bf16.msra.mxu0 %v365
        %382 = vmatpush.bf16.msra.mxu0 %v364
        %383 = vmatmul.bf16.gmra.mxu0 %v373
        %v384 = vpop.f32.mrf.mxu0
        %v385 = vadd.f32 0.0, %v384
        %v386 = vpop.f32.mrf.mxu0
        %v387 = vadd.f32 0.0, %v386
        %388 = vdwg.mxu0
        %v397 = vunpack.c.l.b16 %v328
        %v398 = vunpack.c.l.b16 %v329
        %v399 = vunpack.c.l.b16 %v330
        %v400 = vunpack.c.l.b16 %v331
        %v401 = vunpack.c.l.b16 %v332
        %v402 = vunpack.c.l.b16 %v333
        %v403 = vunpack.c.l.b16 %v334
        %v404 = vunpack.c.l.b16 %v335
        %v405 = vpack.c.b16 %v398, %v397
        %v406 = vpack.c.b16 %v400, %v399
        %v407 = vpack.c.b16 %v402, %v401
        %v408 = vpack.c.b16 %v404, %v403
        %v414 = vsel %vm322, %v327, 0
        %416 = vmatpush.bf16.msra.mxu0 0
        %417 = vmatpush.bf16.msra.mxu0 0
        %418 = vmatpush.bf16.msra.mxu0 0
        %419 = vmatpush.bf16.msra.mxu0 0
        %420 = vmatpush.bf16.msra.mxu0 %v408
        %421 = vmatpush.bf16.msra.mxu0 %v407
        %422 = vmatpush.bf16.msra.mxu0 %v406
        %423 = vmatpush.bf16.msra.mxu0 %v405
        %424 = vmatmul.bf16.gmra.mxu0 %v414
        %v425 = vpop.f32.mrf.mxu0
        %v426 = vadd.f32 %v385, %v425
        %v427 = vpop.f32.mrf.mxu0
        %v428 = vadd.f32 %v387, %v427
        %429 = vdwg.mxu0
        %v430 = vld [vmem:[#allocation2 + $0x2] sm:$0xff]
        %v431 = vld [vmem:[#allocation2 + $0xa] sm:$0xff]
        %v432 = vpack.c.bf16 %v431, %v430
        %s433 = scalar_lea.vmem [#allocation7], 64
        %v434 = vld [vmem:[%s433] sm:$0xf]
        %v435 = vld [vmem:[%s433 + $0x4] sm:$0xf]
        %v436 = vld [vmem:[%s433 + $0x8] sm:$0xf]
        %v437 = vld [vmem:[%s433 + $0xc] sm:$0xf]
        %v438 = vld [vmem:[%s433 + $0x10] sm:$0xf]
        %v439 = vld [vmem:[%s433 + $0x14] sm:$0xf]
        %v440 = vld [vmem:[%s433 + $0x18] sm:$0xf]
        %v441 = vld [vmem:[%s433 + $0x1c] sm:$0xf]
        %v450 = vunpack.c.l.b16 %v434
        %v451 = vunpack.c.l.b16 %v435
        %v452 = vunpack.c.l.b16 %v436
        %v453 = vunpack.c.l.b16 %v437
        %v454 = vunpack.c.l.b16 %v438
        %v455 = vunpack.c.l.b16 %v439
        %v456 = vunpack.c.l.b16 %v440
        %v457 = vunpack.c.l.b16 %v441
        %v458 = vpack.c.b16 %v451, %v450
        %v459 = vpack.c.b16 %v453, %v452
        %v460 = vpack.c.b16 %v455, %v454
        %v461 = vpack.c.b16 %v457, %v456
        %v467 = vsel %vm322, %v432, 0
        %469 = vmatpush.bf16.msra.mxu0 0
        %470 = vmatpush.bf16.msra.mxu0 0
        %471 = vmatpush.bf16.msra.mxu0 0
        %472 = vmatpush.bf16.msra.mxu0 0
        %473 = vmatpush.bf16.msra.mxu0 %v461
        %474 = vmatpush.bf16.msra.mxu0 %v460
        %475 = vmatpush.bf16.msra.mxu0 %v459
        %476 = vmatpush.bf16.msra.mxu0 %v458
        %477 = vmatmul.bf16.gmra.mxu0 %v467
        %v478 = vpop.f32.mrf.mxu0
        %v479 = vadd.f32 0.0, %v478
        %v480 = vpop.f32.mrf.mxu0
        %v481 = vadd.f32 0.0, %v480
        %482 = vdwg.mxu0
        %v483 = vadd.f32 %v426, %v479
        %v484 = vadd.f32 %v428, %v481
        %v485 = vld [vmem:[%s2] sm:$0x1]
        %v487 = vperm.slane %v485, 0
        %v489 = vadd.f32 %v483, %v487
        %v490 = vadd.f32 %v484, %v487
        %v491 = vmax.f32 %v489, 0.0
        %v492 = vmax.f32 %v490, 0.0
        %493 = vst [vmem:[#allocation3] sm:$0x1] 0.0
        %494 = vst [vmem:[#allocation3 + $0x11] sm:$0x1] 0.0
        %495 = vst [vmem:[#allocation3 + $0x1] sm:$0xff] %v491
        %496 = vst [vmem:[#allocation3 + $0x9] sm:$0xff] %v492
        %v497 = vld [vmem:[#allocation3] sm:$0xff]
        %v498 = vld [vmem:[#allocation3 + $0x8] sm:$0xff]
        %v499 = vpack.c.bf16 %v498, %v497
        %v500 = vld [vmem:[#allocation9] sm:$0xf]
        %v501 = vld [vmem:[#allocation9 + $0x4] sm:$0xf]
        %v502 = vld [vmem:[#allocation9 + $0x8] sm:$0xf]
        %v503 = vld [vmem:[#allocation9 + $0xc] sm:$0xf]
        %v504 = vld [vmem:[#allocation9 + $0x10] sm:$0xf]
        %v505 = vld [vmem:[#allocation9 + $0x14] sm:$0xf]
        %v506 = vld [vmem:[#allocation9 + $0x18] sm:$0xf]
        %v507 = vld [vmem:[#allocation9 + $0x1c] sm:$0xf]
        %v508 = vld [vmem:[#allocation9 + $0x20] sm:$0xf]
        %v509 = vld [vmem:[#allocation9 + $0x24] sm:$0xf]
        %v510 = vld [vmem:[#allocation9 + $0x28] sm:$0xf]
        %v511 = vld [vmem:[#allocation9 + $0x2c] sm:$0xf]
        %v512 = vld [vmem:[#allocation9 + $0x30] sm:$0xf]
        %v513 = vld [vmem:[#allocation9 + $0x34] sm:$0xf]
        %v514 = vld [vmem:[#allocation9 + $0x38] sm:$0xf]
        %v515 = vld [vmem:[#allocation9 + $0x3c] sm:$0xf]
        %v516 = vld [vmem:[#allocation3 + $0x1] sm:$0xff]
        %v517 = vld [vmem:[#allocation3 + $0x9] sm:$0xff]
        %v518 = vpack.c.bf16 %v517, %v516
        %s519 = scalar_lea.vmem [#allocation9], 64
        %v520 = vld [vmem:[%s519] sm:$0xf]
        %v521 = vld [vmem:[%s519 + $0x4] sm:$0xf]
        %v522 = vld [vmem:[%s519 + $0x8] sm:$0xf]
        %v523 = vld [vmem:[%s519 + $0xc] sm:$0xf]
        %v524 = vld [vmem:[%s519 + $0x10] sm:$0xf]
        %v525 = vld [vmem:[%s519 + $0x14] sm:$0xf]
        %v526 = vld [vmem:[%s519 + $0x18] sm:$0xf]
        %v527 = vld [vmem:[%s519 + $0x1c] sm:$0xf]
        %v528 = vld [vmem:[%s519 + $0x20] sm:$0xf]
        %v529 = vld [vmem:[%s519 + $0x24] sm:$0xf]
        %v530 = vld [vmem:[%s519 + $0x28] sm:$0xf]
        %v531 = vld [vmem:[%s519 + $0x2c] sm:$0xf]
        %v532 = vld [vmem:[%s519 + $0x30] sm:$0xf]
        %v533 = vld [vmem:[%s519 + $0x34] sm:$0xf]
        %v534 = vld [vmem:[%s519 + $0x38] sm:$0xf]
        %v535 = vld [vmem:[%s519 + $0x3c] sm:$0xf]
        %v552 = vunpack.c.l.b16 %v520
        %v553 = vunpack.c.l.b16 %v521
        %v554 = vunpack.c.l.b16 %v522
        %v555 = vunpack.c.l.b16 %v523
        %v556 = vunpack.c.l.b16 %v524
        %v557 = vunpack.c.l.b16 %v525
        %v558 = vunpack.c.l.b16 %v526
        %v559 = vunpack.c.l.b16 %v527
        %v560 = vunpack.c.l.b16 %v528
        %v561 = vunpack.c.l.b16 %v529
        %v562 = vunpack.c.l.b16 %v530
        %v563 = vunpack.c.l.b16 %v531
        %v564 = vunpack.c.l.b16 %v532
        %v565 = vunpack.c.l.b16 %v533
        %v566 = vunpack.c.l.b16 %v534
        %v567 = vunpack.c.l.b16 %v535
        %v568 = vpack.c.b16 %v553, %v552
        %v569 = vpack.c.b16 %v555, %v554
        %v570 = vpack.c.b16 %v557, %v556
        %v571 = vpack.c.b16 %v559, %v558
        %v572 = vpack.c.b16 %v561, %v560
        %v573 = vpack.c.b16 %v563, %v562
        %v574 = vpack.c.b16 %v565, %v564
        %v575 = vpack.c.b16 %v567, %v566
        %584 = vmatpush.bf16.msra.mxu0 %v575
        %585 = vmatpush.bf16.msra.mxu0 %v574
        %586 = vmatpush.bf16.msra.mxu0 %v573
        %587 = vmatpush.bf16.msra.mxu0 %v572
        %588 = vmatpush.bf16.msra.mxu0 %v571
        %589 = vmatpush.bf16.msra.mxu0 %v570
        %590 = vmatpush.bf16.msra.mxu0 %v569
        %591 = vmatpush.bf16.msra.mxu0 %v568
        %592 = vmatmul.bf16.gmra.mxu0 %v518
        %v593 = vpop.f32.mrf.mxu0
        %v594 = vadd.f32 0.0, %v593
        %v595 = vpop.f32.mrf.mxu0
        %v596 = vadd.f32 0.0, %v595
        %597 = vdwg.mxu0
        %v614 = vunpack.c.l.b16 %v500
        %v615 = vunpack.c.l.b16 %v501
        %v616 = vunpack.c.l.b16 %v502
        %v617 = vunpack.c.l.b16 %v503
        %v618 = vunpack.c.l.b16 %v504
        %v619 = vunpack.c.l.b16 %v505
        %v620 = vunpack.c.l.b16 %v506
        %v621 = vunpack.c.l.b16 %v507
        %v622 = vunpack.c.l.b16 %v508
        %v623 = vunpack.c.l.b16 %v509
        %v624 = vunpack.c.l.b16 %v510
        %v625 = vunpack.c.l.b16 %v511
        %v626 = vunpack.c.l.b16 %v512
        %v627 = vunpack.c.l.b16 %v513
        %v628 = vunpack.c.l.b16 %v514
        %v629 = vunpack.c.l.b16 %v515
        %v630 = vpack.c.b16 %v615, %v614
        %v631 = vpack.c.b16 %v617, %v616
        %v632 = vpack.c.b16 %v619, %v618
        %v633 = vpack.c.b16 %v621, %v620
        %v634 = vpack.c.b16 %v623, %v622
        %v635 = vpack.c.b16 %v625, %v624
        %v636 = vpack.c.b16 %v627, %v626
        %v637 = vpack.c.b16 %v629, %v628
        %646 = vmatpush.bf16.msra.mxu0 %v637
        %647 = vmatpush.bf16.msra.mxu0 %v636
        %648 = vmatpush.bf16.msra.mxu0 %v635
        %649 = vmatpush.bf16.msra.mxu0 %v634
        %650 = vmatpush.bf16.msra.mxu0 %v633
        %651 = vmatpush.bf16.msra.mxu0 %v632
        %652 = vmatpush.bf16.msra.mxu0 %v631
        %653 = vmatpush.bf16.msra.mxu0 %v630
        %654 = vmatmul.bf16.gmra.mxu0 %v499
        %v655 = vpop.f32.mrf.mxu0
        %v656 = vadd.f32 %v594, %v655
        %v657 = vpop.f32.mrf.mxu0
        %v658 = vadd.f32 %v596, %v657
        %659 = vdwg.mxu0
        %v660 = vld [vmem:[#allocation3 + $0x2] sm:$0xff]
        %v661 = vld [vmem:[#allocation3 + $0xa] sm:$0xff]
        %v662 = vpack.c.bf16 %v661, %v660
        %s663 = scalar_lea.vmem [#allocation9], 128
        %v664 = vld [vmem:[%s663] sm:$0xf]
        %v665 = vld [vmem:[%s663 + $0x4] sm:$0xf]
        %v666 = vld [vmem:[%s663 + $0x8] sm:$0xf]
        %v667 = vld [vmem:[%s663 + $0xc] sm:$0xf]
        %v668 = vld [vmem:[%s663 + $0x10] sm:$0xf]
        %v669 = vld [vmem:[%s663 + $0x14] sm:$0xf]
        %v670 = vld [vmem:[%s663 + $0x18] sm:$0xf]
        %v671 = vld [vmem:[%s663 + $0x1c] sm:$0xf]
        %v672 = vld [vmem:[%s663 + $0x20] sm:$0xf]
        %v673 = vld [vmem:[%s663 + $0x24] sm:$0xf]
        %v674 = vld [vmem:[%s663 + $0x28] sm:$0xf]
        %v675 = vld [vmem:[%s663 + $0x2c] sm:$0xf]
        %v676 = vld [vmem:[%s663 + $0x30] sm:$0xf]
        %v677 = vld [vmem:[%s663 + $0x34] sm:$0xf]
        %v678 = vld [vmem:[%s663 + $0x38] sm:$0xf]
        %v679 = vld [vmem:[%s663 + $0x3c] sm:$0xf]
        %v696 = vunpack.c.l.b16 %v664
        %v697 = vunpack.c.l.b16 %v665
        %v698 = vunpack.c.l.b16 %v666
        %v699 = vunpack.c.l.b16 %v667
        %v700 = vunpack.c.l.b16 %v668
        %v701 = vunpack.c.l.b16 %v669
        %v702 = vunpack.c.l.b16 %v670
        %v703 = vunpack.c.l.b16 %v671
        %v704 = vunpack.c.l.b16 %v672
        %v705 = vunpack.c.l.b16 %v673
        %v706 = vunpack.c.l.b16 %v674
        %v707 = vunpack.c.l.b16 %v675
        %v708 = vunpack.c.l.b16 %v676
        %v709 = vunpack.c.l.b16 %v677
        %v710 = vunpack.c.l.b16 %v678
        %v711 = vunpack.c.l.b16 %v679
        %v712 = vpack.c.b16 %v697, %v696
        %v713 = vpack.c.b16 %v699, %v698
        %v714 = vpack.c.b16 %v701, %v700
        %v715 = vpack.c.b16 %v703, %v702
        %v716 = vpack.c.b16 %v705, %v704
        %v717 = vpack.c.b16 %v707, %v706
        %v718 = vpack.c.b16 %v709, %v708
        %v719 = vpack.c.b16 %v711, %v710
        %728 = vmatpush.bf16.msra.mxu0 %v719
        %729 = vmatpush.bf16.msra.mxu0 %v718
        %730 = vmatpush.bf16.msra.mxu0 %v717
        %731 = vmatpush.bf16.msra.mxu0 %v716
        %732 = vmatpush.bf16.msra.mxu0 %v715
        %733 = vmatpush.bf16.msra.mxu0 %v714
        %734 = vmatpush.bf16.msra.mxu0 %v713
        %735 = vmatpush.bf16.msra.mxu0 %v712
        %736 = vmatmul.bf16.gmra.mxu0 %v662
        %v737 = vpop.f32.mrf.mxu0
        %v738 = vadd.f32 0.0, %v737
        %v739 = vpop.f32.mrf.mxu0
        %v740 = vadd.f32 0.0, %v739
        %741 = vdwg.mxu0
        %v742 = vadd.f32 %v656, %v738
        %v743 = vadd.f32 %v658, %v740
        %v744 = vld [vmem:[%s4] sm:$0x1]
        %v746 = vperm.slane %v744, 0
        %v748 = vadd.f32 %v742, %v746
        %v749 = vadd.f32 %v743, %v746
        %v750 = vmax.f32 %v748, 0.0
        %v751 = vmax.f32 %v749, 0.0
        %752 = vst [vmem:[%s308] sm:$0xff] %v750
        %753 = vst [vmem:[%s308 + $0x8] sm:$0xff] %v751
        %v755 = vrot.slane %v750, 1
        %v757 = vmax.f32 %v750, %v755
        %v759 = vrot.slane %v751, 1
        %v761 = vmax.f32 %v751, %v759
        %v763 = vrot.slane %v757, 1
        %v765 = vrot.slane %v757, 2
        %v767 = vrot.slane %v757, 3
        %v770 = vrot.slane %v761, 4
        %v772 = vrot.slane %v761, 5
        %v774 = vrot.slane %v761, 6
        %v776 = vrot.slane %v761, 7
        %vm778 = vcmask 1040384
        %v779 = vsel %vm778, %v757, %v763
        %vm780 = vcmask 1041408
        %v781 = vsel %vm780, %v779, %v765
        %vm782 = vcmask 1042432
        %v783 = vsel %vm782, %v781, %v767
        %vm784 = vcmask 1043456
        %v785 = vsel %vm784, %v783, %v770
        %vm786 = vcmask 1044480
        %v787 = vsel %vm786, %v785, %v772
        %vm788 = vcmask 1045504
        %v789 = vsel %vm788, %v787, %v774
        %vm790 = vcmask 1046528
        %v791 = vsel %vm790, %v789, %v776
        %793 = vrot.lane.b32.xlu0 %v791, 120
        %v794 = vpop.permute.xlu0 %793
        %v796 = vmax.f32 %v791, %v794
        %798 = vrot.lane.b32.xlu0 %v796, 120
        %v799 = vpop.permute.xlu0 %798
        %801 = vrot.lane.b32.xlu0 %v796, 112
        %v802 = vpop.permute.xlu0 %801
        %804 = vrot.lane.b32.xlu0 %v796, 104
        %v805 = vpop.permute.xlu0 %804
        %807 = vrot.lane.b32.xlu0 %v796, 96
        %v808 = vpop.permute.xlu0 %807
        %810 = vrot.lane.b32.xlu0 %v796, 88
        %v811 = vpop.permute.xlu0 %810
        %813 = vrot.lane.b32.xlu0 %v796, 80
        %v814 = vpop.permute.xlu0 %813
        %816 = vrot.lane.b32.xlu0 %v796, 72
        %v817 = vpop.permute.xlu0 %816
        %vm819 = vcmask 64512
        %v820 = vsel %vm819, %v796, %v799
        %vm821 = vcmask 130048
        %v822 = vsel %vm821, %v820, %v802
        %vm823 = vcmask 195584
        %v824 = vsel %vm823, %v822, %v805
        %vm825 = vcmask 261120
        %v826 = vsel %vm825, %v824, %v808
        %vm827 = vcmask 326656
        %v828 = vsel %vm827, %v826, %v811
        %vm829 = vcmask 392192
        %v830 = vsel %vm829, %v828, %v814
        %vm831 = vcmask 457728
        %v832 = vsel %vm831, %v830, %v817
        %833 = vst.msk [vmem:[%s315] sm:$0xff] %vm322, %v832
        %s834 = sand.u32 %s146, 1
        %s835 = scalar_lea.sflag [#allocation6], %s834
        %s836 = sand.u32 %s146, 1
        %s837 = smul.addr %s836, 16
        %s838 = scalar_lea.vmem [#allocation10], %s837
        %s839 = sand.u32 %s172, 1
        %s840 = scalar_lea.sflag [#allocation12], %s839
        %s841 = sand.u32 %s172, 1
        %s842 = smul.addr %s841, 8
        %s843 = scalar_lea.vmem [#allocation11], %s842
        // Predicated region
        $region53: #{tpu_custom_call.1} parent=39 // pred_check
          %p844 = pneg %p156
        $region54: #{tpu_custom_call.1} parent=39 // pred_check_branch
          %846 = sbr.rel (%p844) target = $region56
        $region55: #{tpu_custom_call.1} parent=39 // pred_region
          %848 = vsyncadd %s835, 0
          %s849 = smul.addr %s28, 2
          %s850 = smul.addr %s849, 8
          %s851 = scalar_lea.hbm %s5, %s850
          %s852 = sshll.u32 %s838, 4
          %s853 = int_to_ptr.vmem [resolvable:$true] %s852
          %s854 = sshll.u32 %s851, 4
          %s855 = int_to_ptr.hbm [resolvable:$true] %s854
          %860 = dma.vmem_to_hbm [thread:$0]  %s853, 256, %s855, %s835, 128, 128, 8
        $region56: #{tpu_custom_call.1} parent=39 // pred_fallthru
          _
        // Predicated region
        $region57: #{tpu_custom_call.1} parent=39 // pred_check
          %p861 = pneg %p182
        $region58: #{tpu_custom_call.1} parent=39 // pred_check_branch
          %863 = sbr.rel (%p861) target = $region60
        $region59: #{tpu_custom_call.1} parent=39 // pred_region
          %865 = vsyncadd %s840, 0
          %s866 = smul.addr %s28, 8
          %s867 = scalar_lea.hbm %s6, %s866
          %s869 = sshll.u32 %s843, 4
          %s870 = int_to_ptr.vmem [resolvable:$true] %s869
          %s871 = sshll.u32 %s867, 4
          %s872 = int_to_ptr.hbm [resolvable:$true] %s871
          %874 = dma.vmem_to_hbm [thread:$0]  %s870, 128, %s872, %s840
        $region60: #{tpu_custom_call.1} parent=39 // pred_fallthru
          _
      $region40: #{tpu_custom_call.1} parent=5 // pred_fallthru
        _
      %p875 = scmp.le.s32.totalorder 2, %s23
      // Predicated region
      $region61: #{tpu_custom_call.1} parent=5 // pred_check
        %p876 = pneg %p875
      $region62: #{tpu_custom_call.1} parent=5 // pred_check_branch
        %878 = sbr.rel (%p876) target = $region64
      $region63: #{tpu_custom_call.1} parent=5 // pred_region
        %s879 = ssub.s32 %s23, 2
        // Predicated region
        $region65: #{tpu_custom_call.1} parent=63 // pred_check
          %p880 = pneg %p162
        $region66: #{tpu_custom_call.1} parent=63 // pred_check_branch
          %882 = sbr.rel (%p880) target = $region68
        $region67: #{tpu_custom_call.1} parent=63 // pred_region
          %s883 = sand.u32 %s147, 1
          %s884 = scalar_lea.sflag [#allocation6], %s883
          %s885 = sand.u32 %s147, 1
          %s886 = smul.addr %s885, 16
          %s887 = scalar_lea.vmem [#allocation10], %s886
          %889 = dma.done %s884, 256
        $region68: #{tpu_custom_call.1} parent=63 // pred_fallthru
          _
        // Predicated region
        $region69: #{tpu_custom_call.1} parent=63 // pred_check
          %p890 = pneg %p188
        $region70: #{tpu_custom_call.1} parent=63 // pred_check_branch
          %892 = sbr.rel (%p890) target = $region72
        $region71: #{tpu_custom_call.1} parent=63 // pred_region
          %s893 = sand.u32 %s173, 1
          %s894 = scalar_lea.sflag [#allocation12], %s893
          %s895 = sand.u32 %s173, 1
          %s896 = smul.addr %s895, 8
          %s897 = scalar_lea.vmem [#allocation11], %s896
          %899 = dma.done %s894, 128
        $region72: #{tpu_custom_call.1} parent=63 // pred_fallthru
          _
      $region64: #{tpu_custom_call.1} parent=5 // pred_fallthru
        _
    $region6: #{tpu_custom_call.1} parent=1 // loop_footer
      %s27 = sadd.s32 1, %s23
    $region7: #{tpu_custom_call.1} parent=1 // loop_footer_branch
      %22 = sbr.rel target = $region3
    $region8: #{tpu_custom_call.1} parent=1 // loop_exit
      _
    %900 = vsyncpa [#allocation5], 1
    %s901 = scalar_lea.sflag [#allocation5], 1
    %902 = vsyncpa %s901, 1
    %903 = vsyncpa [#allocation8], 1
    %904 = vsyncpa [#allocation6], 1
    %s905 = scalar_lea.sflag [#allocation6], 1
    %906 = vsyncpa %s905, 1
    %907 = vsyncpa [#allocation12], 1
    %s908 = scalar_lea.sflag [#allocation12], 1
    %909 = vsyncpa %s908, 1

</llo_original>
